<compile_context>
chip_gen: v7x
topology: tpu7x:2x2x1
jax: 0.10.0
libtpu: 0.0.40
codegen_flags: <defaults>
</compile_context>

<pallas_src>
import jax
import jax.numpy as jnp
from jax import lax
from jax.experimental import pallas as pl
from jax.experimental.pallas import tpu as pltpu

EPS = 1e-5


def _round_up(x: int, m: int) -> int:
    return ((x + m - 1) // m) * m


def _pad2d(a, rows, cols):
    r, c = a.shape
    return jnp.pad(a, ((0, rows - r), (0, cols - c)))


def _vmem_capacity_bytes() -> int:
    try:
        return int(pltpu.get_tpu_info().vmem_capacity_bytes)
    except Exception:
        return 64 * 2**20  # conservative (v7x-sized); safe everywhere


# --------------------------------------------------------------------------
# Kernel 1: streamed global-average pooling (NCHW -> (N, C) means)
# --------------------------------------------------------------------------
def _make_pool_kernel(HW, hw_tile, n_hw_steps, lane_w, ragged, inv_hw):
    n_chunks = hw_tile // lane_w

    def pool_kernel(x_ref, pooled_ref, acc_ref):
        k = pl.program_id(1)

        @pl.when(k == 0)
        def _():
            acc_ref[...] = jnp.zeros_like(acc_ref)

        # Lane-aligned partial sums: static 128-wide slices of the x tile are
        # whole-vreg selections, so the steady-state loop is pure VPU adds
        # (no per-step XLU reduce / relayout).
        base = k * hw_tile
        partial = None
        for c in range(n_chunks):
            chunk = x_ref[:, :, c * lane_w:(c + 1) * lane_w].astype(jnp.float32)
            if ragged:
                offs = base + c * lane_w + lax.broadcasted_iota(
                    jnp.int32, (1, 1, lane_w), 2)
                chunk = jnp.where(offs < HW, chunk, 0.0)
            partial = chunk if partial is None else partial + chunk
        acc_ref[...] += partial

        # Single lane-reduce + mean scale, once per N block, in f32.
        @pl.when(k == n_hw_steps - 1)
        def _():
            pooled_ref[...] = (jnp.sum(acc_ref[...], axis=-1) * inv_hw
                               ).astype(pooled_ref.dtype)

    return pool_kernel


# --------------------------------------------------------------------------
# Kernel 2: linear1 (no bias) + BatchNorm1d (train) + ReLU + linear2 (bias)
# Runs once over the full batch so BN statistics are exact.
# --------------------------------------------------------------------------
def _mlp_bn_kernel(pooled_ref, w1_ref, gamma_ref, beta_ref, w2_ref, b2_ref,
                   o_ref):
    pooled = pooled_ref[...]                                  # (N, C) f32 means
    h = jnp.dot(pooled, w1_ref[...], preferred_element_type=jnp.float32)

    # BatchNorm1d, training-mode batch statistics (biased variance, as PyTorch).
    mean = jnp.mean(h, axis=0, keepdims=True)
    var = jnp.mean((h - mean) ** 2, axis=0, keepdims=True)
    h = (h - mean) * lax.rsqrt(var + EPS)
    h = h * gamma_ref[...] + beta_ref[...]

    h = jnp.maximum(h, 0.0)                                   # ReLU

    out = jnp.dot(h, w2_ref[...], preferred_element_type=jnp.float32) + b2_ref[...]
    o_ref[...] = out.astype(o_ref.dtype)


# --------------------------------------------------------------------------
# Wrapper
# --------------------------------------------------------------------------
def byol_projection_head(x_nchw, w1, gamma, beta, w2, b2):
    """x_nchw: (N, C, H, W). w1: (C, hidden), gamma/beta: (hidden,),
    w2: (hidden, out), b2: (out,). Returns (N, out) float32."""
    N, C, H, W = x_nchw.shape
    HW = H * W
    hidden = w1.shape[1]
    out_dim = w2.shape[1]

    phys_vmem = _vmem_capacity_bytes()
    vmem_cap = (phys_vmem * 3) // 4   # ~48 MiB on v7x, ~96 MiB on v5e/v6e

    # x: free reshape only — NO wrapper-side cast or pad (no extra HBM pass).
    x_flat = x_nchw.reshape(N, C, HW)
    x_itemsize = jnp.dtype(x_flat.dtype).itemsize

    # ---- spatial tile ----
    if HW < 128:
        hw_tile = HW           # full extent (e.g. ResNet HW=49)
        lane_w = HW
    else:
        hw_max = 2048 if phys_vmem > 64 * 2**20 else 1024
        # bound a single batch-row slab of one x buffer to ~2 MiB
        row_cap = max(128, ((2 * 2**20) // (C * x_itemsize)) // 128 * 128)
        hw_tile = max(128, min((HW // 128) * 128, hw_max, row_cap))
        lane_w = 128
    n_hw_steps = -(-HW // hw_tile)
    ragged = (HW % hw_tile) != 0

    # ---- batch tile (TN must divide N and be a multiple of 8, or equal N) ----
    per_row = (2 * C * hw_tile * x_itemsize                       # 2x x buffers
               + _round_up(C, 8) * _round_up(lane_w, 128) * 4     # acc scratch
               + 2 * _round_up(C, 128) * 4)                       # pooled block
    tn_cap = max(1, (phys_vmem // 4) // per_row)
    if N <= tn_cap or N < 8:
        TN = N
    else:
        TN = None
        t = min((tn_cap // 8) * 8, (N // 8) * 8)
        while t >= 8:
            if N % t == 0:
                TN = t
                break
            t -= 8
        if TN is None:
            TN = 8 if N % 8 == 0 else N

    grid = (N // TN, n_hw_steps)

    # ---- VMEM budget for the pooling kernel ----
    x_tile_bytes = TN * _round_up(C, 8) * _round_up(hw_tile, 128) * x_itemsize
    acc_bytes = TN * _round_up(C, 8) * _round_up(lane_w, 128) * 4
    pooled_blk = _round_up(TN, 8) * _round_up(C, 128) * 4
    est = 2 * x_tile_bytes + acc_bytes + 2 * pooled_blk
    pool_vmem = int(min(vmem_cap, max(16 * 2**20, 2 * est)))

    pool_kernel = _make_pool_kernel(HW, hw_tile, n_hw_steps, lane_w, ragged,
                                    1.0 / float(HW))

    pooled = pl.pallas_call(
        pool_kernel,
        out_shape=jax.ShapeDtypeStruct((N, C), jnp.float32),
        grid_spec=pltpu.PrefetchScalarGridSpec(
            num_scalar_prefetch=0,
            grid=grid,
            in_specs=[
                # x streamed tile; default double-buffering hides the HBM DMA.
                pl.BlockSpec((TN, C, hw_tile), lambda n, k: (n, 0, k)),
            ],
            out_specs=pl.BlockSpec((TN, C), lambda n, k: (n, 0)),
            scratch_shapes=[pltpu.VMEM((TN, C, lane_w), jnp.float32)],
        ),
        compiler_params=pltpu.CompilerParams(
            # N axis is per-sample independent -> shard across v7x's 2 TCs;
            # the spatial reduction axis stays sequential.
            dimension_semantics=("parallel", "arbitrary"),
            vmem_limit_bytes=pool_vmem,
        ),
    )(x_flat)

    # ---- tiny full-batch MLP/BN epilogue (single invocation, f32) ----
    HID_P = _round_up(hidden, 128)
    OUT_P = _round_up(out_dim, 128)
    w1_p = _pad2d(w1.astype(jnp.float32), C, HID_P)
    gamma_p = _pad2d(gamma.reshape(1, hidden).astype(jnp.float32), 1, HID_P)
    beta_p = _pad2d(beta.reshape(1, hidden).astype(jnp.float32), 1, HID_P)
    w2_p = _pad2d(w2.astype(jnp.float32), HID_P, OUT_P)
    b2_p = _pad2d(b2.reshape(1, out_dim).astype(jnp.float32), 1, OUT_P)

    ep_est = 4 * (_round_up(N, 8) * _round_up(C, 128)
                  + _round_up(C, 8) * HID_P
                  + HID_P * OUT_P
                  + _round_up(N, 8) * HID_P
                  + 3 * HID_P + OUT_P
                  + _round_up(N, 8) * OUT_P)
    ep_vmem = int(min(vmem_cap, max(16 * 2**20, 2 * ep_est)))

    out_padded = pl.pallas_call(
        _mlp_bn_kernel,
        out_shape=jax.ShapeDtypeStruct((N, OUT_P), jnp.float32),
        compiler_params=pltpu.CompilerParams(vmem_limit_bytes=ep_vmem),
    )(pooled, w1_p, gamma_p, beta_p, w2_p, b2_p)

    return out_padded[:, :out_dim]


# --------------------------------------------------------------------------
# Pure-JAX f32 reference (matches PyTorch's training-mode forward).
# --------------------------------------------------------------------------
def reference(x_nchw, w1, gamma, beta, w2, b2):
    N, C, H, W = x_nchw.shape
    pooled = jnp.mean(x_nchw.reshape(N, C, H * W).astype(jnp.float32), axis=-1)
    h = jnp.dot(pooled, w1.astype(jnp.float32),
                preferred_element_type=jnp.float32)
    mean = jnp.mean(h, axis=0, keepdims=True)
    var = jnp.mean((h - mean) ** 2, axis=0, keepdims=True)   # biased, as PyTorch
    h = (h - mean) * lax.rsqrt(var + EPS) * gamma[None, :] + beta[None, :]
    h = jnp.maximum(h, 0.0)
    return jnp.dot(h, w2.astype(jnp.float32),
                   preferred_element_type=jnp.float32) + b2[None, :]


if __name__ == "__main__":
    # Small, module-consistent shapes.
    N, C, H, W = 2, 4, 16, 16
    HIDDEN, OUT = 32, 16

    key = jax.random.PRNGKey(0)
    kx, kw1, kg, kb, kw2, kb2 = jax.random.split(key, 6)

    x = jax.random.normal(kx, (N, C, H, W), dtype=jnp.float32)

    # Deterministic synthetic parameters (shapes from BYOLProjectionHead).
    w1 = jax.random.normal(kw1, (C, HIDDEN), dtype=jnp.float32) * 0.1      # linear1 (no bias)
    gamma = 1.0 + 0.1 * jax.random.normal(kg, (HIDDEN,), dtype=jnp.float32)  # bnorm1 weight
    beta = 0.1 * jax.random.normal(kb, (HIDDEN,), dtype=jnp.float32)         # bnorm1 bias
    w2 = jax.random.normal(kw2, (HIDDEN, OUT), dtype=jnp.float32) * 0.1     # linear2 weight
    b2 = jax.random.normal(kb2, (OUT,), dtype=jnp.float32) * 0.1            # linear2 bias

    out = byol_projection_head(x, w1, gamma, beta, w2, b2)
    out = jax.block_until_ready(out)

    ref = reference(x, w1, gamma, beta, w2, b2)
    assert out.shape == (N, OUT)
    max_diff = float(jnp.max(jnp.abs(out - ref)))
    # Tolerance covers MXU f32 pass-decomposition differences vs XLA's dot.
    assert jnp.allclose(out, ref, atol=2e-2, rtol=2e-2), (
        f"mismatch vs JAX reference, max abs diff = {max_diff}")

    print("KERNEL_OK")
</pallas_src>

<mosaic_0001>
module attributes {stable_mosaic.version = 11 : i64} {
  func.func @pool_kernel(%arg0: i32, %arg1: i32, %arg2: memref<2x4x256xf32, #tpu.memory_space<vmem>>, %arg3: memref<2x4xf32, #tpu.memory_space<vmem>>, %arg4: memref<2x4x128xf32, #tpu.memory_space<vmem>>) attributes {dimension_semantics = [#tpu.dimension_semantics<parallel>, #tpu.dimension_semantics<arbitrary>], iteration_bounds = array<i64: 1, 1>, scalar_prefetch = 0 : i64, scratch_operands = 1 : i64, tpu.core_type = #tpu.core_type<tc>, window_params = [{transform_indices = @transform_0, window_bounds = array<i64: 2, 4, 256>}, {transform_indices = @transform_1, window_bounds = array<i64: 2, 4>}]} {
    %c0_i32 = arith.constant 0 : i32
    %0 = arith.cmpi eq, %arg1, %c0_i32 : i32
    %1 = arith.extui %0 : i1 to i32
    %c0_i32_0 = arith.constant 0 : i32
    %2 = arith.cmpi ne, %1, %c0_i32_0 : i32
    scf.if %2 {
      %cst = arith.constant 0.000000e+00 : f32
      %12 = vector.broadcast %cst : f32 to vector<2x4x128xf32>
      %c0_13 = arith.constant 0 : index
      %c0_14 = arith.constant 0 : index
      %c0_15 = arith.constant 0 : index
      %13 = vector.load %arg4[%c0_13, %c0_14, %c0_15] : memref<2x4x128xf32, #tpu.memory_space<vmem>>, vector<2x4x128xf32>
      tpu.vector_store %arg4[%c0_13, %c0_14, %c0_15], %12 {strides = array<i32>} : memref<2x4x128xf32, #tpu.memory_space<vmem>>, vector<2x4x128xf32>,
    } else {
    }
    %c0 = arith.constant 0 : index
    %c0_1 = arith.constant 0 : index
    %c0_2 = arith.constant 0 : index
    %3 = vector.load %arg2[%c0, %c0_1, %c0_2] : memref<2x4x256xf32, #tpu.memory_space<vmem>>, vector<2x4x128xf32>
    %c0_3 = arith.constant 0 : index
    %c0_4 = arith.constant 0 : index
    %c128 = arith.constant 128 : index
    %4 = vector.load %arg2[%c0_3, %c0_4, %c128] : memref<2x4x256xf32, #tpu.memory_space<vmem>>, vector<2x4x128xf32>
    %5 = arith.addf %3, %4 : vector<2x4x128xf32>
    %c0_5 = arith.constant 0 : index
    %c0_6 = arith.constant 0 : index
    %c0_7 = arith.constant 0 : index
    %6 = vector.load %arg4[%c0_5, %c0_6, %c0_7] : memref<2x4x128xf32, #tpu.memory_space<vmem>>, vector<2x4x128xf32>
    %7 = arith.addf %6, %5 : vector<2x4x128xf32>
    %c0_8 = arith.constant 0 : index
    %c0_9 = arith.constant 0 : index
    %c0_10 = arith.constant 0 : index
    %8 = vector.load %arg4[%c0_8, %c0_9, %c0_10] : memref<2x4x128xf32, #tpu.memory_space<vmem>>, vector<2x4x128xf32>
    tpu.vector_store %arg4[%c0_8, %c0_9, %c0_10], %7 {strides = array<i32>} : memref<2x4x128xf32, #tpu.memory_space<vmem>>, vector<2x4x128xf32>,
    %c0_i32_11 = arith.constant 0 : i32
    %9 = arith.cmpi eq, %arg1, %c0_i32_11 : i32
    %10 = arith.extui %9 : i1 to i32
    %c0_i32_12 = arith.constant 0 : i32
    %11 = arith.cmpi ne, %10, %c0_i32_12 : i32
    scf.if %11 {
      %c0_13 = arith.constant 0 : index
      %c0_14 = arith.constant 0 : index
      %c0_15 = arith.constant 0 : index
      %12 = vector.load %arg4[%c0_13, %c0_14, %c0_15] : memref<2x4x128xf32, #tpu.memory_space<vmem>>, vector<2x4x128xf32>
      %cst = arith.constant dense<0.000000e+00> : vector<2x4xf32>
      %13 = vector.multi_reduction <add>, %12, %cst [2] : vector<2x4x128xf32> to vector<2x4xf32>
      %cst_16 = arith.constant 3.906250e-03 : f32
      %14 = vector.broadcast %cst_16 : f32 to vector<2x4xf32>
      %15 = arith.mulf %13, %14 : vector<2x4xf32>
      %c0_17 = arith.constant 0 : index
      %c0_18 = arith.constant 0 : index
      %16 = vector.load %arg3[%c0_17, %c0_18] : memref<2x4xf32, #tpu.memory_space<vmem>>, vector<2x4xf32>
      tpu.vector_store %arg3[%c0_17, %c0_18], %15 {strides = array<i32>} : memref<2x4xf32, #tpu.memory_space<vmem>>, vector<2x4xf32>,
    } else {
    }
    return
  }
  func.func @transform_0(%arg0: i32, %arg1: i32) -> (i32, i32, i32) {
    %c0_i32 = arith.constant 0 : i32
    %c0_i32_0 = arith.constant 0 : i32
    return %arg0, %c0_i32, %arg1 : i32, i32, i32
  }
  func.func @transform_1(%arg0: i32, %arg1: i32) -> (i32, i32) {
    %c0_i32 = arith.constant 0 : i32
    %c0_i32_0 = arith.constant 0 : i32
    return %arg0, %c0_i32 : i32, i32
  }
}

</mosaic_0001>

<llo_original>
// kernel: tpu_custom_call.1
$region0: #{tpu_custom_call.1}
  #allocation0 [shape = 'u32[]', space=smem, size = 0x4, offset = 0x4, fixed_abs, tag = 'smem constant byte address 0x4 - core index']
  #allocation1 [shape = 'u32[144,128]{1,0:T(1,128)}', space=vmem, size = 0x12000, scoped, tag = 'internal scratch']
  #allocation2 [shape = 'f32[2,4,128]{2,1,0:T(4,128)}', space=vmem, size = 0x1000, scoped, tag = 'scratch operand']
  %s0 = inlined_call_operand.hbm [shape: f32[2,4,256], index: 0, kind: input, shape index: {}]
  %s1 = inlined_call_operand.hbm [shape: f32[2,4], index: 1, kind: output, shape index: {}]
  %s2 = sld [smem:[#allocation0]]
  $region26: #{tpu_custom_call.1} parent=0
    _
  %s4 = ssub.s32 1, %s2
  %s5 = scalar_select 0, %s4, %s2
  $region1: #{tpu_custom_call.1} parent=0
    #allocation3 [shape = 'u8[8192]{0}', space=vmem, size = 0x2000, scoped, tag = 'input window, operand 0, single buffered']
    #allocation4 [shape = 's32[1]{0}', space=sflag, size = 0x4, scoped, tag = 'scoped memory for tpu_custom_call.1']
    #allocation5 [shape = 's32[1]{0}', space=sflag, size = 0x4, scoped, tag = 'scoped memory for tpu_custom_call.1']
    #allocation6 [shape = 'u8[1024]{0}', space=vmem, size = 0x400, scoped, tag = 'output window, operand 0, single buffered']
    %6 = vsyncpa [#allocation4], 0
    %7 = vsyncpa [#allocation5], 0
    // Predicated region
    $region2: #{tpu_custom_call.1} parent=1 // pred_check
      _
    $region3: #{tpu_custom_call.1} parent=1 // pred_check_branch
      %9 = sbr.rel (0) target = $region5
    $region4: #{tpu_custom_call.1} parent=1 // pred_region
      %s11 = ssub.s32 256, 256
      %12 = vsyncadd [#allocation4], %s11
      %s13 = sshll.u32 [#allocation3], 4
      %s14 = int_to_ptr.vmem [resolvable:$true] %s13
      %19 = dma.hbm_to_vmem [thread:$0]  %s0, 256, %s14, [#allocation4], 128, 128, 8
    $region5: #{tpu_custom_call.1} parent=1 // pred_fallthru
      _
    // Predicated region
    $region6: #{tpu_custom_call.1} parent=1 // pred_check
      _
    $region7: #{tpu_custom_call.1} parent=1 // pred_check_branch
      %21 = sbr.rel (0) target = $region9
    $region8: #{tpu_custom_call.1} parent=1 // pred_region
      %22 = dma.done [#allocation4], 256
    $region9: #{tpu_custom_call.1} parent=1 // pred_fallthru
      _
    %p23 = scmp.eq.s32.totalorder 0, 0
    // Predicated region
    $region10: #{tpu_custom_call.1} parent=1 // pred_check
      %p24 = pneg %p23
    $region11: #{tpu_custom_call.1} parent=1 // pred_check_branch
      %26 = sbr.rel (%p24) target = $region13
    $region12: #{tpu_custom_call.1} parent=1 // pred_region
      %27 = vst [vmem:[#allocation2] sm:$0xf] 0.0
      %28 = vst [vmem:[#allocation2 + $0x4] sm:$0xf] 0.0
    $region13: #{tpu_custom_call.1} parent=1 // pred_fallthru
      _
    %v29 = vld [vmem:[#allocation3] sm:$0xf]
    %v30 = vld [vmem:[#allocation3 + $0x8] sm:$0xf]
    %v31 = vld [vmem:[#allocation3 + $0x4] sm:$0xf]
    %v32 = vld [vmem:[#allocation3 + $0xc] sm:$0xf]
    %v33 = vadd.f32 %v29, %v31
    %v34 = vadd.f32 %v30, %v32
    %v35 = vld [vmem:[#allocation2] sm:$0xf]
    %v36 = vld [vmem:[#allocation2 + $0x4] sm:$0xf]
    %v37 = vadd.f32 %v35, %v33
    %v38 = vadd.f32 %v36, %v34
    %39 = vst [vmem:[#allocation2] sm:$0xf] %v37
    %40 = vst [vmem:[#allocation2 + $0x4] sm:$0xf] %v38
    // Predicated region
    $region14: #{tpu_custom_call.1} parent=1 // pred_check
      %p41 = pneg %p23
    $region15: #{tpu_custom_call.1} parent=1 // pred_check_branch
      %43 = sbr.rel (%p41) target = $region17
    $region16: #{tpu_custom_call.1} parent=1 // pred_region
      %v44 = vld [vmem:[#allocation2] sm:$0xf]
      %v45 = vld [vmem:[#allocation2 + $0x4] sm:$0xf]
      %vm46 = vcmask 1043456
      %v47 = vsel %vm46, %v44, 0.0
      %48 = vadd.xlane.f32.xlu0 %v47
      %v49 = vpop.xlane.xlu0 %48
      %v50 = vsel %vm46, %v45, 0.0
      %51 = vadd.xlane.f32.xlu0 %v50
      %v52 = vpop.xlane.xlu0 %51
      %v53 = vmul.f32 %v49, 0.00390625
      %v54 = vmul.f32 %v52, 0.00390625
      %v57 = vlaneseq
      %v58 = vand.u32 %v57, 127
      %v59 = vlaneseq
      %v60 = vshrl.u32 %v59, 7
      %v61 = vsub.s32 %v58, %v60
      %v62 = vrot.slane %v53, %v61
      %v63 = vlaneseq
      %v64 = vshrl.u32 %v63, 7
      %v65 = vsub.s32 %v58, %v64
      %v66 = vrot.slane %v54, %v65
      %vm67 = vcmask 1041409
      %v68 = vsel %vm67, %v66, %v62
      %vm70 = vcmask 25600
      %71 = vst.msk [vmem:[#allocation6] sm:$0x3] %vm70, %v68
    $region17: #{tpu_custom_call.1} parent=1 // pred_fallthru
      _
    // Predicated region
    $region18: #{tpu_custom_call.1} parent=1 // pred_check
      _
    $region19: #{tpu_custom_call.1} parent=1 // pred_check_branch
      %73 = sbr.rel (0) target = $region21
    $region20: #{tpu_custom_call.1} parent=1 // pred_region
      %s75 = ssub.s32 32, 32
      %76 = vsyncadd [#allocation5], %s75
      %s78 = sshll.u32 [#allocation6], 4
      %s79 = int_to_ptr.vmem [resolvable:$true] %s78
      %81 = dma.vmem_to_hbm [thread:$0]  %s79, 32, %s1, [#allocation5]
    $region21: #{tpu_custom_call.1} parent=1 // pred_fallthru
      _
    // Predicated region
    $region22: #{tpu_custom_call.1} parent=1 // pred_check
      _
    $region23: #{tpu_custom_call.1} parent=1 // pred_check_branch
      %83 = sbr.rel (0) target = $region25
    $region24: #{tpu_custom_call.1} parent=1 // pred_region
      %84 = dma.done [#allocation5], 32
    $region25: #{tpu_custom_call.1} parent=1 // pred_fallthru
      _
    %85 = vsyncpa [#allocation4], 1
    %86 = vsyncpa [#allocation5], 1

</llo_original>
